<compile_context>
chip_gen: v6e
topology: v6e:2x2x1
jax: 0.10.0
libtpu: 0.0.40
codegen_flags: <defaults>
</compile_context>

<pallas_src>
import math

import jax
import jax.numpy as jnp
from jax import lax
from jax.experimental import pallas as pl
from jax.experimental.pallas import tpu as pltpu

_EPS = 1e-07


def _round_up(x, m):
    return ((x + m - 1) // m) * m


def _tpu_info():
    """(physical VMEM bytes, TensorCores per chip) with conservative fallbacks."""
    vmem = 64 * 1024 * 1024          # safe default: v7x per-core VMEM
    cores = 1
    try:
        info = pltpu.get_tpu_info()
        vmem = int(getattr(info, "vmem_capacity_bytes", vmem))
        for name in ("num_cores", "num_tensorcores", "tensorcore_count",
                     "cores_per_chip"):
            v = getattr(info, name, None)
            if v:
                cores = int(v)
                break
    except Exception:
        pass
    return vmem, cores


def _pick_tile(n, bytes_per_unit, budget_bytes, align, cap_units, requested):
    """Largest tile (rows or lane-columns) fitting the VMEM budget.

    Returns (tile, n_padded).  If the whole extent fits, the tile equals n
    (full-extent blocks have no (8,128) alignment requirement); otherwise the
    tile is aligned and n is padded up to a multiple of it (wrapper masks the
    padded rows out of the final mean).
    """
    if requested is not None:
        t = int(requested)
    else:
        t = budget_bytes // max(int(bytes_per_unit), 1)
        t = min(t, cap_units)
    if t >= n:
        return n, n
    t = max(align, (t // align) * align)
    return t, _round_up(n, t)


def _make_jsd_kernel(weights, class_axis):
    """Kernel factory.  weights = [w_label, w_pred_0, ...] (static Python floats).

    class_axis: axis of the class dimension inside each prediction block
      (0 -> transposed (C, tile_n) layout, 1 -> row (tile_rows, C) layout).
    """
    w_label = float(weights[0])
    w_preds = [float(w) for w in weights[1:]]
    num_preds = len(w_preds)

    def jsd_kernel(*refs):
        pred_refs = refs[:num_preds]          # logits blocks
        labels_ref = refs[num_preds]          # (1, tn) or (tn, 1) int32
        out_ref = refs[num_preds + 1]         # per-row weighted KL sums

        shape = pred_refs[0].shape
        labels = labels_ref[...]
        cls_ids = lax.broadcasted_iota(jnp.int32, shape, class_axis)
        is_label = cls_ids == labels          # broadcast over the class axis

        # --- softmax + log-softmax (one exp/elem, one log/row per pred) ----
        probs, logps = [], []
        for pr in pred_refs:
            x = pr[...].astype(jnp.float32)
            xmax = jnp.max(x, axis=class_axis, keepdims=True)
            xs = x - xmax
            e = jnp.exp(xs)
            denom = jnp.sum(e, axis=class_axis, keepdims=True)
            probs.append(e * pl.reciprocal(denom, approx=False))
            logps.append(xs - jnp.log(denom))            # log-softmax identity

        # --- weighted mean distribution; w0*onehot folded into one select ---
        m = jnp.where(is_label, jnp.float32(w_label), jnp.float32(0.0))
        for w, p in zip(w_preds, probs):
            m = m + w * p
        # m <= 1 by construction (weights sum to 1): only the lower clamp.
        m_log = jnp.log(jnp.maximum(m, _EPS))

        # --- KL(onehot || m): only the label entry contributes (-m_log) -----
        total = -w_label * jnp.sum(jnp.where(is_label, m_log, 0.0),
                                   axis=class_axis, keepdims=True)

        # --- KL(p_j || m): p*(p_log - m_log); already 0 where p underflows ---
        for w, p, lp in zip(w_preds, probs, logps):
            total = total + w * jnp.sum(p * (lp - m_log),
                                        axis=class_axis, keepdims=True)

        out_ref[...] = total

    return jsd_kernel


def jsd_loss(pred, labels, num_classes, weights, tile=None):
    """Pallas implementation of JensenShannonDivergenceWeightedScaled.forward."""
    preds = list(pred) if isinstance(pred, (list, tuple)) else [pred]
    preds = [jnp.asarray(p) for p in preds]
    num_preds = len(preds)
    assert len(weights) == num_preds + 1
    assert abs(1.0 - sum(float(w) for w in weights)) < 1e-3

    n, c = preds[0].shape
    assert c == num_classes
    labels = jnp.asarray(labels, jnp.int32)

    vmem_cap, n_cores = _tpu_info()
    # Per-generation VMEM sizing: ~3/4 of physical, capped; budget for the tile
    # picker is half of that (double-buffered inputs + f32 temporaries counted).
    vmem_limit = max(32 << 20, min((vmem_cap * 3) // 4, 100 << 20))
    budget = vmem_limit // 2
    in_item = jnp.dtype(preds[0].dtype).itemsize   # bf16 logits supported

    transposed = c < 128    # lane-pack samples onto lanes when classes are few

    if transposed:
        # (C, N) layout: classes on sublanes, samples on lanes.
        c_sub = _round_up(c, 8)
        bytes_per_col = c_sub * (2 * num_preds * in_item + (3 * num_preds + 3) * 4)
        tile_n, n_pad = _pick_tile(n, bytes_per_col, budget, 128, 32768, tile)
        pad = n_pad - n
        xs = [jnp.pad(p.T, ((0, 0), (0, pad))) if pad else p.T for p in preds]
        lab = labels.reshape(1, n)
        lab = jnp.pad(lab, ((0, 0), (0, pad))) if pad else lab
        grid = (n_pad // tile_n,)
        pred_spec = pl.BlockSpec((c, tile_n), lambda i: (0, i))
        lab_spec = pl.BlockSpec((1, tile_n), lambda i: (0, i))
        out_spec = pl.BlockSpec((1, tile_n), lambda i: (0, i))   # lane-dense
        out_shape = jax.ShapeDtypeStruct((1, n_pad), jnp.float32)
        class_axis = 0
    else:
        # (N, C) layout: already lane-dense along classes.
        c_lane = _round_up(c, 128)
        bytes_per_row = c_lane * (2 * num_preds * in_item + (3 * num_preds + 3) * 4)
        tile_rows, n_pad = _pick_tile(n, bytes_per_row, budget, 8, 4096, tile)
        pad = n_pad - n
        xs = [jnp.pad(p, ((0, pad), (0, 0))) if pad else p for p in preds]
        lab = labels.reshape(n, 1)
        lab = jnp.pad(lab, ((0, pad), (0, 0))) if pad else lab
        grid = (n_pad // tile_rows,)
        pred_spec = pl.BlockSpec((tile_rows, c), lambda i: (i, 0))
        lab_spec = pl.BlockSpec((tile_rows, 1), lambda i: (i, 0))
        out_spec = pl.BlockSpec((tile_rows, 1), lambda i: (i, 0))
        out_shape = jax.ShapeDtypeStruct((n_pad, 1), jnp.float32)
        class_axis = 1

    kernel = _make_jsd_kernel(weights, class_axis)

    # Split the row grid across both TensorCores where the chip has them (v7x);
    # plain "parallel" elsewhere (measured no-op on single-core chips).
    dim_sem = ((pltpu.CORE_PARALLEL,) if (n_cores >= 2 and grid[0] > 1)
               else ("parallel",))

    row_kl = pl.pallas_call(
        kernel,
        out_shape=out_shape,
        grid_spec=pltpu.PrefetchScalarGridSpec(
            num_scalar_prefetch=0,
            grid=grid,
            in_specs=[pred_spec] * num_preds + [lab_spec],
            out_specs=out_spec,
        ),
        compiler_params=pltpu.CompilerParams(
            dimension_semantics=dim_sem,
            vmem_limit_bytes=vmem_limit,
        ),
    )(*xs, lab)

    per_row = row_kl[0, :n] if transposed else row_kl[:n, 0]
    w0 = float(weights[0])
    scale = -1.0 / ((1.0 - w0) * math.log(1.0 - w0))
    # Final batch mean + constant scale in the wrapper: keeps the grid fully
    # parallel (no sequential scalar accumulator inside the kernel).
    return (scale / n) * jnp.sum(per_row)


def jsd_ref(pred, labels, num_classes, weights):
    """Pure-JAX reference mirroring the PyTorch module exactly."""
    preds = list(pred) if isinstance(pred, (list, tuple)) else [pred]
    probs = [jax.nn.softmax(p.astype(jnp.float32), axis=1) for p in preds]
    onehot = jax.nn.one_hot(labels, num_classes, dtype=jnp.float32)
    distribs = [onehot] + probs
    mean_d = sum(w * d for w, d in zip(weights, distribs))
    mean_log = jnp.log(jnp.clip(mean_d, _EPS, 1.0))

    def custom_kl(pred_log, target):
        out_pos = target * (jnp.log(jnp.maximum(target, _EPS)) - pred_log)
        out = jnp.where(target > 0, out_pos, 0.0)
        return jnp.mean(jnp.sum(out, axis=1))

    jsw = sum(w * custom_kl(mean_log, d) for w, d in zip(weights, distribs))
    scale = -1.0 / ((1.0 - weights[0]) * math.log(1.0 - weights[0]))
    return scale * jsw


if __name__ == "__main__":
    key = jax.random.PRNGKey(0)
    k1, k2, k3, k4, k5, k6, k7 = jax.random.split(key, 7)

    # --- Test 1: single prediction, small C -> lane-packed transposed path ---
    nc1, n1 = 16, 32
    w1 = [0.7, 0.3]
    p1 = jax.random.normal(k1, (n1, nc1), dtype=jnp.float32)
    l1 = jax.random.randint(k2, (n1,), 0, nc1, dtype=jnp.int32)
    out1 = jax.block_until_ready(jsd_loss(p1, l1, nc1, w1))
    ref1 = jsd_ref(p1, l1, nc1, w1)
    assert jnp.allclose(out1, ref1, rtol=1e-5, atol=1e-5), (out1, ref1)

    # --- Test 2: list of predictions, N not a multiple of the forced tile ----
    # (exercises wrapper-side padding + a multi-step parallel grid)
    nc2, n2 = 16, 160
    w2 = [0.5, 0.3, 0.2]
    p2a = jax.random.normal(k3, (n2, nc2), dtype=jnp.float32)
    p2b = jax.random.normal(k4, (n2, nc2), dtype=jnp.float32)
    l2 = jax.random.randint(k5, (n2,), 0, nc2, dtype=jnp.int32)
    out2 = jax.block_until_ready(jsd_loss([p2a, p2b], l2, nc2, w2, tile=128))
    ref2 = jsd_ref([p2a, p2b], l2, nc2, w2)
    assert jnp.allclose(out2, ref2, rtol=1e-5, atol=1e-5), (out2, ref2)

    # --- Test 3: wide C (>= 128) -> row-layout (already lane-dense) path -----
    nc3, n3 = 128, 32
    w3 = [0.6, 0.4]
    p3 = jax.random.normal(k6, (n3, nc3), dtype=jnp.float32)
    l3 = jax.random.randint(k7, (n3,), 0, nc3, dtype=jnp.int32)
    out3 = jax.block_until_ready(jsd_loss(p3, l3, nc3, w3))
    ref3 = jsd_ref(p3, l3, nc3, w3)
    assert jnp.allclose(out3, ref3, rtol=1e-5, atol=1e-5), (out3, ref3)

    print("KERNEL_OK")
</pallas_src>

<mosaic_0001>
module attributes {stable_mosaic.version = 11 : i64} {
  func.func @jsd_kernel(%arg0: i32, %arg1: memref<16x32xf32, #tpu.memory_space<vmem>>, %arg2: memref<1x32xi32, #tpu.memory_space<vmem>>, %arg3: memref<1x32xf32, #tpu.memory_space<vmem>>) attributes {dimension_semantics = [#tpu.dimension_semantics<parallel>], iteration_bounds = array<i64: 1>, scalar_prefetch = 0 : i64, scratch_operands = 0 : i64, tpu.core_type = #tpu.core_type<tc>, window_params = [{transform_indices = @transform_0, window_bounds = array<i64: 16, 32>}, {transform_indices = @transform_1, window_bounds = array<i64: 1, 32>}, {transform_indices = @transform_2, window_bounds = array<i64: 1, 32>}]} {
    %c0 = arith.constant 0 : index
    %c0_0 = arith.constant 0 : index
    %0 = vector.load %arg2[%c0, %c0_0] : memref<1x32xi32, #tpu.memory_space<vmem>>, vector<1x32xi32>
    %1 = tpu.iota {dimensions = array<i32: 0>} : vector<16x32xi32>
    %2 = vector.broadcast %0 : vector<1x32xi32> to vector<16x32xi32>
    %3 = arith.cmpi eq, %1, %2 : vector<16x32xi32>
    %c0_1 = arith.constant 0 : index
    %c0_2 = arith.constant 0 : index
    %4 = vector.load %arg1[%c0_1, %c0_2] : memref<16x32xf32, #tpu.memory_space<vmem>>, vector<16x32xf32>
    %cst = arith.constant dense<0xFF800000> : vector<32xf32>
    %5 = vector.multi_reduction <maximumf>, %4, %cst [0] : vector<16x32xf32> to vector<32xf32>
    %6 = vector.shape_cast %5 : vector<32xf32> to vector<1x32xf32>
    %7 = vector.broadcast %6 : vector<1x32xf32> to vector<16x32xf32>
    %8 = arith.subf %4, %7 : vector<16x32xf32>
    %9 = math.exp %8 : vector<16x32xf32>
    %cst_3 = arith.constant dense<0.000000e+00> : vector<32xf32>
    %10 = vector.multi_reduction <add>, %9, %cst_3 [0] : vector<16x32xf32> to vector<32xf32>
    %11 = vector.shape_cast %10 : vector<32xf32> to vector<1x32xf32>
    %12 = tpu.reciprocal %11 : vector<1x32xf32> -> vector<1x32xf32>
    %13 = vector.broadcast %12 : vector<1x32xf32> to vector<16x32xf32>
    %14 = arith.mulf %9, %13 : vector<16x32xf32>
    %15 = math.log %11 : vector<1x32xf32>
    %16 = vector.broadcast %15 : vector<1x32xf32> to vector<16x32xf32>
    %17 = arith.subf %8, %16 : vector<16x32xf32>
    %cst_4 = arith.constant 0.699999988 : f32
    %cst_5 = arith.constant 0.000000e+00 : f32
    %18 = vector.broadcast %cst_4 : f32 to vector<16x32xf32>
    %19 = vector.broadcast %cst_5 : f32 to vector<16x32xf32>
    %20 = arith.select %3, %18, %19 : vector<16x32xi1>, vector<16x32xf32>
    %cst_6 = arith.constant 3.000000e-01 : f32
    %21 = vector.broadcast %cst_6 : f32 to vector<16x32xf32>
    %22 = arith.mulf %21, %14 : vector<16x32xf32>
    %23 = arith.addf %20, %22 : vector<16x32xf32>
    %cst_7 = arith.constant 1.000000e-07 : f32
    %24 = vector.broadcast %cst_7 : f32 to vector<16x32xf32>
    %25 = arith.maximumf %23, %24 : vector<16x32xf32>
    %26 = math.log %25 : vector<16x32xf32>
    %cst_8 = arith.constant 0.000000e+00 : f32
    %27 = vector.broadcast %cst_8 : f32 to vector<16x32xf32>
    %28 = arith.select %3, %26, %27 : vector<16x32xi1>, vector<16x32xf32>
    %cst_9 = arith.constant dense<0.000000e+00> : vector<32xf32>
    %29 = vector.multi_reduction <add>, %28, %cst_9 [0] : vector<16x32xf32> to vector<32xf32>
    %30 = vector.shape_cast %29 : vector<32xf32> to vector<1x32xf32>
    %cst_10 = arith.constant -0.699999988 : f32
    %31 = vector.broadcast %cst_10 : f32 to vector<1x32xf32>
    %32 = arith.mulf %31, %30 : vector<1x32xf32>
    %33 = arith.subf %17, %26 : vector<16x32xf32>
    %34 = arith.mulf %14, %33 : vector<16x32xf32>
    %cst_11 = arith.constant dense<0.000000e+00> : vector<32xf32>
    %35 = vector.multi_reduction <add>, %34, %cst_11 [0] : vector<16x32xf32> to vector<32xf32>
    %36 = vector.shape_cast %35 : vector<32xf32> to vector<1x32xf32>
    %cst_12 = arith.constant 3.000000e-01 : f32
    %37 = vector.broadcast %cst_12 : f32 to vector<1x32xf32>
    %38 = arith.mulf %37, %36 : vector<1x32xf32>
    %39 = arith.addf %32, %38 : vector<1x32xf32>
    %c0_13 = arith.constant 0 : index
    %c0_14 = arith.constant 0 : index
    %40 = vector.load %arg3[%c0_13, %c0_14] : memref<1x32xf32, #tpu.memory_space<vmem>>, vector<1x32xf32>
    tpu.vector_store %arg3[%c0_13, %c0_14], %39 {strides = array<i32>} : memref<1x32xf32, #tpu.memory_space<vmem>>, vector<1x32xf32>,
    return
  }
  func.func @transform_0(%arg0: i32) -> (i32, i32) {
    %c0_i32 = arith.constant 0 : i32
    %c0_i32_0 = arith.constant 0 : i32
    return %c0_i32, %arg0 : i32, i32
  }
  func.func @transform_1(%arg0: i32) -> (i32, i32) {
    %c0_i32 = arith.constant 0 : i32
    %c0_i32_0 = arith.constant 0 : i32
    return %c0_i32, %arg0 : i32, i32
  }
  func.func @transform_2(%arg0: i32) -> (i32, i32) {
    %c0_i32 = arith.constant 0 : i32
    %c0_i32_0 = arith.constant 0 : i32
    return %c0_i32, %arg0 : i32, i32
  }
}

</mosaic_0001>

<llo_original>
// kernel: tpu_custom_call.1
$region0: #{tpu_custom_call.1}
  #allocation0 [shape = 'u32[]', space=smem, size = 0x4, offset = 0x4, fixed_abs, tag = 'smem constant byte address 0x4 - core index']
  #allocation1 [shape = 'u32[144,128]{1,0:T(1,128)}', space=vmem, size = 0x12000, scoped, tag = 'internal scratch']
  %s0 = inlined_call_operand.hbm [shape: f32[16,32], index: 0, kind: input, shape index: {}]
  %s1 = inlined_call_operand.vmem [shape: s32[1,32], index: 1, kind: input, shape index: {}]
  %s2 = inlined_call_operand.hbm [shape: f32[1,32], index: 2, kind: output, shape index: {}]
  %s3 = sld [smem:[#allocation0]]
  $region22: #{tpu_custom_call.1} parent=0
    _
  %s5 = ssub.s32 1, %s3
  %s6 = scalar_select 0, %s5, %s3
  $region1: #{tpu_custom_call.1} parent=0
    #allocation2 [shape = 'u8[8192]{0}', space=vmem, size = 0x2000, scoped, tag = 'input window, operand 0, single buffered']
    #allocation3 [shape = 's32[1]{0}', space=sflag, size = 0x4, scoped, tag = 'scoped memory for tpu_custom_call.1']
    #allocation4 [shape = 's32[1]{0}', space=sflag, size = 0x4, scoped, tag = 'scoped memory for tpu_custom_call.1']
    #allocation5 [shape = 'u8[512]{0}', space=vmem, size = 0x400, scoped, tag = 'output window, operand 0, single buffered']
    %7 = vsyncpa [#allocation3], 0
    %8 = vsyncpa [#allocation4], 0
    // Predicated region
    $region2: #{tpu_custom_call.1} parent=1 // pred_check
      _
    $region3: #{tpu_custom_call.1} parent=1 // pred_check_branch
      %10 = sbr.rel (0) target = $region5
    $region4: #{tpu_custom_call.1} parent=1 // pred_region
      %s12 = ssub.s32 256, 256
      %13 = vsyncadd [#allocation3], %s12
      %s14 = sshll.u32 [#allocation2], 4
      %s15 = int_to_ptr.vmem [resolvable:$true] %s14
      %20 = dma.hbm_to_vmem [thread:$0]  %s0, 256, %s15, [#allocation3], 128, 128, 8
    $region5: #{tpu_custom_call.1} parent=1 // pred_fallthru
      _
    // Predicated region
    $region6: #{tpu_custom_call.1} parent=1 // pred_check
      _
    $region7: #{tpu_custom_call.1} parent=1 // pred_check_branch
      %22 = sbr.rel (0) target = $region9
    $region8: #{tpu_custom_call.1} parent=1 // pred_region
      _
    $region9: #{tpu_custom_call.1} parent=1 // pred_fallthru
      _
    // Predicated region
    $region10: #{tpu_custom_call.1} parent=1 // pred_check
      _
    $region11: #{tpu_custom_call.1} parent=1 // pred_check_branch
      %24 = sbr.rel (0) target = $region13
    $region12: #{tpu_custom_call.1} parent=1 // pred_region
      %25 = dma.done [#allocation3], 256
    $region13: #{tpu_custom_call.1} parent=1 // pred_fallthru
      _
    %v26 = vld [vmem:[%s1] sm:$0x1]
    %v27 = vlaneseq
    %v28 = vshrl.u32 %v27, 7
    %v29 = vadd.s32 %v28, 8
    %v30 = vlaneseq
    %v31 = vshrl.u32 %v30, 7
    %v32 = vsub.s32 0, %v31
    %v33 = vrot.slane %v26, %v32
    %vm34 = vcmp.eq.s32.totalorder %v28, %v33
    %vm35 = vcmp.eq.s32.totalorder %v29, %v33
    %v36 = vld [vmem:[#allocation2] sm:$0xff]
    %v37 = vld [vmem:[#allocation2 + $0x8] sm:$0xff]
    %vm38 = vcmask 261120
    %v39 = vsel %vm38, %v36, -inf
    %v40 = vsel %vm38, %v37, -inf
    %v41 = vmax.f32 %v39, %v40
    %v42 = vrot.slane %v41, 4
    %v43 = vmax.f32 %v41, %v42
    %v44 = vrot.slane %v43, 2
    %v45 = vmax.f32 %v43, %v44
    %v46 = vrot.slane %v45, 1
    %v47 = vmax.f32 %v45, %v46
    %v48 = vsub.f32 %v36, %v47
    %v49 = vsub.f32 %v37, %v47
    %v50 = vmul.f32 %v48, 1.442695
    %v51 = vpow.pop %v50
    %v52 = vmul.f32 %v49, 1.442695
    %v53 = vpow.pop %v52
    %v54 = vsel %vm38, %v51, 0.0
    %v55 = vsel %vm38, %v53, 0.0
    %v56 = vadd.f32 %v54, %v55
    %v57 = vrot.slane %v56, 4
    %v58 = vadd.f32 %v56, %v57
    %v59 = vrot.slane %v58, 2
    %v60 = vadd.f32 %v58, %v59
    %v61 = vrot.slane %v60, 1
    %v62 = vadd.f32 %v60, %v61
    %v63 = vrcp.pop %v62
    %v64 = vmul.f32 %v51, %v63
    %v65 = vmul.f32 %v53, %v63
    %v66 = vlog2.pop %v62
    %v67 = vmul.f32 %v66, 0.6931472
    %v68 = vsub.f32 %v48, %v67
    %v69 = vsub.f32 %v49, %v67
    %v70 = vsel %vm34, 0.7, 0.0
    %v71 = vsel %vm35, 0.7, 0.0
    %v72 = vmul.f32 %v64, 0.3
    %v73 = vmul.f32 %v65, 0.3
    %v74 = vadd.f32 %v70, %v72
    %v75 = vadd.f32 %v71, %v73
    %v76 = vmax.f32 %v74, 1e-07
    %v77 = vmax.f32 %v75, 1e-07
    %v78 = vlog2.pop %v76
    %v79 = vmul.f32 %v78, 0.6931472
    %v80 = vlog2.pop %v77
    %v81 = vmul.f32 %v80, 0.6931472
    %v82 = vsel %vm34, %v79, 0.0
    %v83 = vsel %vm35, %v81, 0.0
    %v84 = vsel %vm38, %v82, 0.0
    %v85 = vsel %vm38, %v83, 0.0
    %v86 = vadd.f32 %v84, %v85
    %v87 = vrot.slane %v86, 4
    %v88 = vadd.f32 %v86, %v87
    %v89 = vrot.slane %v88, 2
    %v90 = vadd.f32 %v88, %v89
    %v91 = vrot.slane %v90, 1
    %v92 = vadd.f32 %v90, %v91
    %v93 = vmul.f32 %v92, -0.7
    %v94 = vsub.f32 %v68, %v79
    %v95 = vsub.f32 %v69, %v81
    %v96 = vmul.f32 %v64, %v94
    %v97 = vmul.f32 %v65, %v95
    %v98 = vsel %vm38, %v96, 0.0
    %v99 = vsel %vm38, %v97, 0.0
    %v100 = vadd.f32 %v98, %v99
    %v101 = vrot.slane %v100, 4
    %v102 = vadd.f32 %v100, %v101
    %v103 = vrot.slane %v102, 2
    %v104 = vadd.f32 %v102, %v103
    %v105 = vrot.slane %v104, 1
    %v106 = vadd.f32 %v104, %v105
    %v107 = vmul.f32 %v106, 0.3
    %v108 = vadd.f32 %v93, %v107
    %vm109 = vcmask 253952
    %110 = vst.msk [vmem:[#allocation5] sm:$0x1] %vm109, %v108
    // Predicated region
    $region14: #{tpu_custom_call.1} parent=1 // pred_check
      _
    $region15: #{tpu_custom_call.1} parent=1 // pred_check_branch
      %112 = sbr.rel (0) target = $region17
    $region16: #{tpu_custom_call.1} parent=1 // pred_region
      %s114 = ssub.s32 16, 16
      %115 = vsyncadd [#allocation4], %s114
      %s117 = sshll.u32 [#allocation5], 4
      %s118 = int_to_ptr.vmem [resolvable:$true] %s117
      %120 = dma.vmem_to_hbm [thread:$0]  %s118, 16, %s2, [#allocation4]
    $region17: #{tpu_custom_call.1} parent=1 // pred_fallthru
      _
    // Predicated region
    $region18: #{tpu_custom_call.1} parent=1 // pred_check
      _
    $region19: #{tpu_custom_call.1} parent=1 // pred_check_branch
      %122 = sbr.rel (0) target = $region21
    $region20: #{tpu_custom_call.1} parent=1 // pred_region
      %123 = dma.done [#allocation4], 16
    $region21: #{tpu_custom_call.1} parent=1 // pred_fallthru
      _
    %124 = vsyncpa [#allocation3], 1
    %125 = vsyncpa [#allocation4], 1

</llo_original>
